<compile_context>
chip_gen: v5e
topology: v5e:2x2
jax: 0.10.0
libtpu: 0.0.40
codegen_flags: <defaults>
</compile_context>

<pallas_src>
import math

import jax
import jax.numpy as jnp
from jax.experimental import pallas as pl
from jax.experimental.pallas import tpu as pltpu


def _round_up(n, m):
    return -(-n // m) * m


def _vmem_capacity_bytes():
    """Physical VMEM of the current TPU generation (conservative fallback)."""
    try:
        cap = int(pltpu.get_tpu_info().vmem_capacity_bytes)
        if cap > 0:
            return cap
    except Exception:
        pass
    return 64 * 1024 * 1024  # v7x-sized fallback is safe on every generation


# ---------------------------------------------------------------------------
# Stage 1: xw = x @ W_pad   (tiny vs. the adj GEMM; exact f32 MXU compute)
# ---------------------------------------------------------------------------
def _xw_kernel(x_ref, w_ref, o_ref):
    # x_ref: (tm, Fin) f32, w_ref: (Fin, Fout_pad) f32, o_ref: (tm, Fout_pad).
    o_ref[...] = jnp.dot(
        x_ref[...], w_ref[...], preferred_element_type=jnp.float32
    ).astype(o_ref.dtype)


def _x_times_w(x2, w_pad, xw_dtype):
    rows, fin = x2.shape
    fout_pad = w_pad.shape[1]
    # rows is a multiple of 128 here; keep >=2 grid steps when possible (v7x).
    tm = rows
    for cand in (512, 256, 128):
        if rows % cand == 0 and rows // cand >= 2:
            tm = cand
            break
    return pl.pallas_call(
        _xw_kernel,
        out_shape=jax.ShapeDtypeStruct((rows, fout_pad), xw_dtype),
        grid_spec=pltpu.PrefetchScalarGridSpec(
            num_scalar_prefetch=0,
            grid=(rows // tm,),
            in_specs=[
                pl.BlockSpec((tm, fin), lambda i: (i, 0)),
                pl.BlockSpec((fin, fout_pad), lambda i: (0, 0)),  # VMEM resident
            ],
            out_specs=pl.BlockSpec((tm, fout_pad), lambda i: (i, 0)),
        ),
        compiler_params=pltpu.CompilerParams(
            dimension_semantics=("parallel",)),
    )(x2, w_pad)


# ---------------------------------------------------------------------------
# Stage 2: out = adj @ xw + b   (HBM-bound adjacency stream)
# ---------------------------------------------------------------------------
def _make_adj_xw_kernel(fout_pad, compute_dtype):
    def kernel(adj_ref, xw_ref, b_ref, o_ref):
        # adj_ref: (tb, tn, Npad), xw_ref: (tb, Npad, Fout_pad),
        # b_ref: (1, Fout_pad) f32, o_ref: (tb, tn, Fout_pad).
        adj = adj_ref[...]
        if adj.dtype != compute_dtype:
            # e.g. int8 -> bf16; VPU upcast is filler hidden under the adj DMA.
            adj = adj.astype(compute_dtype)
        acc = jnp.einsum("bij,bjf->bif", adj, xw_ref[...],
                         preferred_element_type=jnp.float32)
        o_ref[...] = (acc + b_ref[...].reshape(1, 1, fout_pad)).astype(o_ref.dtype)

    return kernel


def _choose_tiles(batch, n_pad, fout_pad, adj_itemsize, xw_itemsize,
                  out_itemsize, needs_cast, budget):
    """Pick (tb, tn) so the *complete* double-buffered working set fits VMEM."""
    tn_cands = [c for c in (1024, 768, 512, 384, 256, 128) if n_pad % c == 0]
    if not tn_cands:
        tn_cands = [n_pad]  # unreachable: n_pad is a multiple of 128

    def footprint(tb, tn):
        f = 2 * tb * tn * n_pad * adj_itemsize          # adj stream, dbl-buffered
        if needs_cast:
            f += tb * tn * n_pad * xw_itemsize          # in-kernel adj upcast temp
        f += 2 * tb * n_pad * fout_pad * xw_itemsize    # xw blocks (reused over ri)
        f += 2 * tb * tn * fout_pad * out_itemsize      # output blocks
        f += tb * tn * fout_pad * 4                     # f32 accumulator temp
        f += 2 * fout_pad * 4                           # bias (dbl-buffered)
        return f

    tn = tn_cands[-1]
    for cand in tn_cands:                               # largest tn that fits
        if footprint(1, cand) <= budget:
            tn = cand
            break

    tb = 1
    for cand in range(batch, 0, -1):                    # largest tb that fits
        if batch % cand == 0 and footprint(cand, tn) <= budget:
            tb = cand
            break

    # Keep >=2 grid programs so both v7x TensorCores get work.
    if (batch // tb) * (n_pad // tn) < 2:
        if batch >= 2:
            tb = max(d for d in range(1, batch // 2 + 1) if batch % d == 0)
        elif n_pad >= 256:
            half = n_pad // 2
            tn = half if (n_pad % half == 0 and half % 128 == 0) else 128
    return tb, tn


def graph_conv_layer(x, adj, weight_t, bias, *,
                     adj_dtype=jnp.float32,
                     xw_dtype=jnp.float32,
                     out_dtype=jnp.float32):
    """GCN layer forward: out = (adj @ x) @ W + b, computed as adj @ (x @ W) + b.

    x: (B, N, Fin), adj: (B, N, N), weight_t: (Fin, Fout) (= W^T of nn.Linear),
    bias: (Fout,).

    adj_dtype : dtype adj is streamed in from HBM.  float32 (default) is exact
        for any adjacency; int8 / bfloat16 are exact for 0/1 masks and cut the
        dominant HBM stream 4x / 2x (opt-in).
    xw_dtype  : MXU operand dtype for the big GEMM.  float32 (default) is
        exact; bfloat16 uses the full-rate bf16 MXU path (~1e-3 rel error).
    out_dtype : kernel output dtype (float32 default; bfloat16 halves writeback).
    Accumulation is always float32.
    """
    B, N, Fin = x.shape
    Fout = weight_t.shape[1]
    adj_dtype = jnp.dtype(adj_dtype)
    xw_dtype = jnp.dtype(xw_dtype)
    out_dtype = jnp.dtype(out_dtype)

    n_pad = _round_up(max(N, 128), 128)
    fout_pad = _round_up(max(Fout, 128), 128)

    # Zero-padded rows/cols are inert for adj @ (x @ W); sliced off at the end.
    x_pad = jnp.zeros((B, n_pad, Fin), jnp.float32).at[:, :N, :].set(
        x.astype(jnp.float32))
    adj_pad = jnp.zeros((B, n_pad, n_pad), adj_dtype).at[:, :N, :N].set(
        adj.astype(adj_dtype))
    w_pad = jnp.zeros((Fin, fout_pad), jnp.float32).at[:, :Fout].set(
        weight_t.astype(jnp.float32))
    b_pad = jnp.zeros((1, fout_pad), jnp.float32).at[:, :Fout].set(
        bias.astype(jnp.float32).reshape(1, Fout))

    # Stage 1: xw = x @ W  (exact f32 matmul, cast to xw_dtype on the way out).
    xw = _x_times_w(x_pad.reshape(B * n_pad, Fin), w_pad, xw_dtype)
    xw = xw.reshape(B, n_pad, fout_pad)

    # Stage 2 tiling: generation-aware VMEM budget.
    vmem_cap = _vmem_capacity_bytes()
    budget = int(vmem_cap * 0.55)
    needs_cast = adj_dtype != xw_dtype
    tb, tn = _choose_tiles(B, n_pad, fout_pad, adj_dtype.itemsize,
                           xw_dtype.itemsize, out_dtype.itemsize,
                           needs_cast, budget)
    # ri innermost (last grid axis) -> xw / bias blocks are reused across ri.
    grid = (B // tb, n_pad // tn)

    cost = pl.CostEstimate(
        flops=2 * B * n_pad * n_pad * fout_pad,
        transcendentals=0,
        bytes_accessed=(B * n_pad * n_pad * adj_dtype.itemsize
                        + B * n_pad * fout_pad * xw_dtype.itemsize
                        + B * n_pad * fout_pad * out_dtype.itemsize
                        + fout_pad * 4),
    )

    # TODO(synk): the contraction (N) axis of the adj GEMM is not tiled; for
    # extremely large N a K-tiled accumulator variant would be needed to keep
    # the per-batch xw slab inside VMEM.
    out = pl.pallas_call(
        _make_adj_xw_kernel(fout_pad, xw_dtype),
        out_shape=jax.ShapeDtypeStruct((B, n_pad, fout_pad), out_dtype),
        grid_spec=pltpu.PrefetchScalarGridSpec(
            num_scalar_prefetch=0,
            grid=grid,
            in_specs=[
                # adj: row-tiled, the HBM-bound stream.
                pl.BlockSpec((tb, tn, n_pad), lambda bi, ri: (bi, ri, 0)),
                # xw: constant over ri -> stays VMEM resident within a bi.
                pl.BlockSpec((tb, n_pad, fout_pad), lambda bi, ri: (bi, 0, 0)),
                # bias: constant index map -> VMEM resident.
                pl.BlockSpec((1, fout_pad), lambda bi, ri: (0, 0)),
            ],
            out_specs=pl.BlockSpec((tb, tn, fout_pad),
                                   lambda bi, ri: (bi, ri, 0)),
        ),
        compiler_params=pltpu.CompilerParams(
            dimension_semantics=("parallel", "parallel"),
            vmem_limit_bytes=int(vmem_cap * 0.85),
        ),
        cost_estimate=cost,
    )(adj_pad, xw, b_pad)

    return out[:, :N, :Fout].astype(out_dtype)


def init_params(key, in_features, out_features):
    """Deterministic init mirroring nn.Linear's default uniform init."""
    kw, kb = jax.random.split(key)
    bound = 1.0 / math.sqrt(in_features)
    # nn.Linear weight is (out, in); we store it transposed as (in, out).
    weight_t = jax.random.uniform(
        kw, (in_features, out_features), jnp.float32, -bound, bound)
    bias = jax.random.uniform(kb, (out_features,), jnp.float32, -bound, bound)
    return weight_t, bias


if __name__ == "__main__":
    key = jax.random.PRNGKey(0)
    k_x, k_adj, k_p = jax.random.split(key, 3)

    B, N = 2, 16
    in_features, out_features = 32, 64

    x = jax.random.normal(k_x, (B, N, in_features), jnp.float32)
    adj = (jax.random.uniform(k_adj, (B, N, N)) > 0.5).astype(jnp.float32)
    weight_t, bias = init_params(k_p, in_features, out_features)

    # Plain-XLA reference.
    ref_h = jnp.einsum("bij,bjf->bif", adj, x,
                       precision=jax.lax.Precision.HIGHEST)
    ref = jnp.einsum("bnf,fo->bno", ref_h, weight_t,
                     precision=jax.lax.Precision.HIGHEST) + bias

    # 1) Default exact path (f32 adj stream, f32 MXU operands).
    out = jax.block_until_ready(graph_conv_layer(x, adj, weight_t, bias))
    assert out.shape == (B, N, out_features)
    assert jnp.allclose(out, ref, atol=1e-2, rtol=1e-2), \
        float(jnp.max(jnp.abs(out - ref)))

    # 2) Opt-in fast path for 0/1 masks: int8 adj stream + bf16 MXU operands.
    out_fast = jax.block_until_ready(
        graph_conv_layer(x, adj, weight_t, bias,
                         adj_dtype=jnp.int8, xw_dtype=jnp.bfloat16))
    assert jnp.allclose(out_fast, ref, atol=1.5e-1, rtol=5e-2), \
        float(jnp.max(jnp.abs(out_fast - ref)))

    # 3) Weighted (row-normalized) adjacency stays on the exact f32 path.
    adj_w = adj / jnp.maximum(adj.sum(-1, keepdims=True), 1.0)
    ref_hw = jnp.einsum("bij,bjf->bif", adj_w, x,
                        precision=jax.lax.Precision.HIGHEST)
    ref_w = jnp.einsum("bnf,fo->bno", ref_hw, weight_t,
                       precision=jax.lax.Precision.HIGHEST) + bias
    out_w = jax.block_until_ready(graph_conv_layer(x, adj_w, weight_t, bias))
    assert jnp.allclose(out_w, ref_w, atol=1e-2, rtol=1e-2), \
        float(jnp.max(jnp.abs(out_w - ref_w)))

    print("KERNEL_OK")
</pallas_src>

<mosaic_0001>
module attributes {stable_mosaic.version = 11 : i64} {
  func.func @_xw_kernel(%arg0: i32, %arg1: memref<128x32xf32, #tpu.memory_space<vmem>>, %arg2: memref<32x128xf32, #tpu.memory_space<vmem>>, %arg3: memref<128x128xf32, #tpu.memory_space<vmem>>) attributes {dimension_semantics = [#tpu.dimension_semantics<parallel>], iteration_bounds = array<i64: 2>, scalar_prefetch = 0 : i64, scratch_operands = 0 : i64, tpu.core_type = #tpu.core_type<tc>, window_params = [{transform_indices = @transform_0, window_bounds = array<i64: 128, 32>}, {pipeline_mode = #tpu.pipeline_mode<synchronous>, transform_indices = @transform_1, window_bounds = array<i64: 32, 128>}, {transform_indices = @transform_2, window_bounds = array<i64: 128, 128>}]} {
    %c0 = arith.constant 0 : index
    %c0_0 = arith.constant 0 : index
    %0 = vector.load %arg1[%c0, %c0_0] : memref<128x32xf32, #tpu.memory_space<vmem>>, vector<128x32xf32>
    %c0_1 = arith.constant 0 : index
    %c0_2 = arith.constant 0 : index
    %1 = vector.load %arg2[%c0_1, %c0_2] : memref<32x128xf32, #tpu.memory_space<vmem>>, vector<32x128xf32>
    %cst = arith.constant dense<0.000000e+00> : vector<128x128xf32>
    %2 = tpu.matmul %0, %1, %cst {dimension_numbers = #tpu.dot_dimension_numbers<[1], [0], [0], [1], [0, 0, 1, 1], [], []>} : vector<128x32xf32>, vector<32x128xf32>, vector<128x128xf32> -> vector<128x128xf32>
    %c0_3 = arith.constant 0 : index
    %c0_4 = arith.constant 0 : index
    %3 = vector.load %arg3[%c0_3, %c0_4] : memref<128x128xf32, #tpu.memory_space<vmem>>, vector<128x128xf32>
    tpu.vector_store %arg3[%c0_3, %c0_4], %2 {strides = array<i32>} : memref<128x128xf32, #tpu.memory_space<vmem>>, vector<128x128xf32>,
    return
  }
  func.func @transform_0(%arg0: i32) -> (i32, i32) {
    %c0_i32 = arith.constant 0 : i32
    %c0_i32_0 = arith.constant 0 : i32
    return %arg0, %c0_i32 : i32, i32
  }
  func.func @transform_1(%arg0: i32) -> (i32, i32) {
    %c0_i32 = arith.constant 0 : i32
    %c0_i32_0 = arith.constant 0 : i32
    %c0_i32_1 = arith.constant 0 : i32
    return %c0_i32, %c0_i32_0 : i32, i32
  }
  func.func @transform_2(%arg0: i32) -> (i32, i32) {
    %c0_i32 = arith.constant 0 : i32
    %c0_i32_0 = arith.constant 0 : i32
    return %arg0, %c0_i32 : i32, i32
  }
}

</mosaic_0001>

<llo_original>
// kernel: tpu_custom_call.1
$region0: #{tpu_custom_call.1}
  #allocation0 [shape = 'u32[]', space=smem, size = 0x4, offset = 0x4, fixed_abs, tag = 'smem constant byte address 0x4 - core index']
  #allocation1 [shape = 'u32[72,128]{1,0:T(1,128)}', space=vmem, size = 0x9000, scoped, tag = 'internal scratch']
  %s0 = inlined_call_operand.vmem [shape: f32[256,32], index: 0, kind: input, shape index: {}]
  %s1 = inlined_call_operand.vmem [shape: f32[32,128], index: 1, kind: input, shape index: {}]
  %s2 = inlined_call_operand.hbm [shape: f32[256,128], index: 2, kind: output, shape index: {}]
  %s3 = sld [smem:[#allocation0]]
  $region41: #{tpu_custom_call.1} parent=0
    _
  %s5 = ssub.s32 1, %s3
  %s6 = scalar_select 0, %s5, %s3
  $region1: #{tpu_custom_call.1} parent=0
    #allocation2 [shape = 'u8[131072]{0}', space=vmem, size = 0x20000, scoped, tag = 'output window, operand 0']
    #allocation3 [shape = 's32[2]{0}', space=sflag, size = 0x8, scoped, tag = 'scoped memory for tpu_custom_call.1']
    %7 = vsyncpa [#allocation3], 0
    %s8 = scalar_lea.sflag [#allocation3], 1
    %9 = vsyncpa %s8, 0
    loop: start=0, step=1, limit=4
    $region2: #{tpu_custom_call.1} parent=1 // loop_pre_header
      _
    $region3: #{tpu_custom_call.1} parent=1 // loop_header
      %s11 = sphi 0, %s15
      %p12 = scmp.ge.s32.totalorder %s11, 4
      %s21 = sphi 0, %s23
      %s24 = sphi 0, %s21
      %s25 = sphi 0, %s24
      %s41 = sphi 0, %s25
      %s45 = sphi 0, %s45
      %s47 = sphi 0, %s45
      %s48 = sphi 0, %s47
      %s62 = sphi 0, %s48
      %s68 = sphi 0, %s70
      %s71 = sphi 0, %s68
      %s72 = sphi 0, %s71
      %s88 = sphi 0, %s72
    $region4: #{tpu_custom_call.1} parent=1 // loop_header_branch
      %14 = sbr.rel (%p12) target = $region8
    $region5: #{tpu_custom_call.1} parent=1 // loop_body
      %s16 = ssub.s32 %s11, 1
      %s17 = ssub.s32 %s11, 2
      %s18 = sadd.s32 %s11, 1
      %s19 = ssub.s32 %s11, %s18
      %p20 = scmp.eq.s32.totalorder %s19, 0
      %s22 = sadd.s32 %s21, 1
      %s23 = scalar_select %p20, %s21, %s22
      %p26 = pneg %p20
      %p27 = scmp.eq.s32.totalorder %s11, 1
      %p28 = por %p26, %p27
      %p29 = scmp.ne.s32.totalorder %s21, %s24
      %p30 = scmp.eq.s32.totalorder %s11, 0
      %p31 = por %p29, %p30
      %p32 = scmp.ne.s32.totalorder %s21, %s24
      %p33 = scmp.eq.s32.totalorder %s16, 1
      %p34 = por %p32, %p33
      %p35 = scmp.ne.s32.totalorder %s24, %s25
      %p36 = scmp.eq.s32.totalorder %s16, 0
      %p37 = por %p35, %p36
      %p38 = scmp.ne.s32.totalorder %s24, %s25
      %p39 = scmp.eq.s32.totalorder %s17, 1
      %p40 = por %p38, %p39
      %p42 = scmp.ne.s32.totalorder %s25, %s41
      %p43 = scmp.eq.s32.totalorder %s17, 0
      %p44 = por %p42, %p43
      %s46 = sadd.s32 %s45, 1
      %p49 = scmp.eq.s32.totalorder %s11, 1
      %p50 = scmp.ne.s32.totalorder %s45, %s47
      %p51 = scmp.eq.s32.totalorder %s11, 0
      %p52 = por %p50, %p51
      %p53 = scmp.ne.s32.totalorder %s45, %s47
      %p54 = scmp.eq.s32.totalorder %s16, 1
      %p55 = por %p53, %p54
      %p56 = scmp.ne.s32.totalorder %s47, %s48
      %p57 = scmp.eq.s32.totalorder %s16, 0
      %p58 = por %p56, %p57
      %p59 = scmp.ne.s32.totalorder %s47, %s48
      %p60 = scmp.eq.s32.totalorder %s17, 1
      %p61 = por %p59, %p60
      %p63 = scmp.ne.s32.totalorder %s48, %s62
      %p64 = scmp.eq.s32.totalorder %s17, 0
      %p65 = por %p63, %p64
      %s66 = ssub.s32 %s11, %s18
      %p67 = scmp.eq.s32.totalorder %s66, 0
      %s69 = sadd.s32 %s68, 1
      %s70 = scalar_select %p67, %s68, %s69
      %p73 = pneg %p67
      %p74 = scmp.eq.s32.totalorder %s11, 1
      %p75 = por %p73, %p74
      %p76 = scmp.ne.s32.totalorder %s68, %s71
      %p77 = scmp.eq.s32.totalorder %s11, 0
      %p78 = por %p76, %p77
      %p79 = scmp.ne.s32.totalorder %s68, %s71
      %p80 = scmp.eq.s32.totalorder %s16, 1
      %p81 = por %p79, %p80
      %p82 = scmp.ne.s32.totalorder %s71, %s72
      %p83 = scmp.eq.s32.totalorder %s16, 0
      %p84 = por %p82, %p83
      %p85 = scmp.ne.s32.totalorder %s71, %s72
      %p86 = scmp.eq.s32.totalorder %s17, 1
      %p87 = por %p85, %p86
      %p89 = scmp.ne.s32.totalorder %s72, %s88
      %p90 = scmp.eq.s32.totalorder %s17, 0
      %p91 = por %p89, %p90
      %p92 = scmp.le.s32.totalorder 1, %s11
      %p93 = scmp.lt.s32.totalorder %s11, 3
      %p94 = pnand %p92, %p93
      %p95 = pneg %p94
      // Predicated region
      $region9: #{tpu_custom_call.1} parent=5 // pred_check
        _
      $region10: #{tpu_custom_call.1} parent=5 // pred_check_branch
        %97 = sbr.rel (%p94) target = $region12
      $region11: #{tpu_custom_call.1} parent=5 // pred_region
        %s98 = ssub.s32 %s11, 1
        // Predicated region
        $region13: #{tpu_custom_call.1} parent=11 // pred_check
          %p99 = pneg %p58
        $region14: #{tpu_custom_call.1} parent=11 // pred_check_branch
          %101 = sbr.rel (%p99) target = $region16
        $region15: #{tpu_custom_call.1} parent=11 // pred_region
          _
        $region16: #{tpu_custom_call.1} parent=11 // pred_fallthru
          _
      $region12: #{tpu_custom_call.1} parent=5 // pred_fallthru
        _
      %p102 = scmp.lt.s32.totalorder %s11, 2
      // Predicated region
      $region17: #{tpu_custom_call.1} parent=5 // pred_check
        %p103 = pneg %p102
      $region18: #{tpu_custom_call.1} parent=5 // pred_check_branch
        %105 = sbr.rel (%p103) target = $region20
      $region19: #{tpu_custom_call.1} parent=5 // pred_region
        // Predicated region
        $region21: #{tpu_custom_call.1} parent=19 // pred_check
          %p106 = pneg %p31
        $region22: #{tpu_custom_call.1} parent=19 // pred_check_branch
          %108 = sbr.rel (%p106) target = $region24
        $region23: #{tpu_custom_call.1} parent=19 // pred_region
          %s109 = smul.u32 16, %s11
          %p110 = scmp.lt.s32.totalorder %s109, 31
          %s111 = scalar_select %p110, %s109, 31
          %s112 = smul.addr %s111, 8
          %s113 = scalar_lea.vmem %s0, %s112
          %s114 = smul.u32 16, %s11
        $region24: #{tpu_custom_call.1} parent=19 // pred_fallthru
          _
      $region20: #{tpu_custom_call.1} parent=5 // pred_fallthru
        _
      %p115 = scmp.le.s32.totalorder 1, %s11
      %p116 = scmp.lt.s32.totalorder %s11, 3
      %p117 = pnand %p115, %p116
      %p118 = pneg %p117
      // Predicated region
      $region25: #{tpu_custom_call.1} parent=5 // pred_check
        _
      $region26: #{tpu_custom_call.1} parent=5 // pred_check_branch
        %120 = sbr.rel (%p117) target = $region28
      $region27: #{tpu_custom_call.1} parent=5 // pred_region
        %s121 = ssub.s32 %s11, 1
        %s122 = smul.u32 16, %s16
        %p123 = scmp.lt.s32.totalorder %s122, 31
        %s124 = scalar_select %p123, %s122, 31
        %s125 = smul.addr %s124, 8
        %s126 = scalar_lea.vmem %s0, %s125
        %p127 = pneg %p37
        %p128 = pneg %p34
        %p129 = pneg %p58
        %p130 = pneg %p55
        %p131 = pneg %p84
        %p132 = pneg %p81
        %s133 = sand.u32 %s71, 1
        %s134 = scalar_lea.sflag [#allocation3], %s133
        %s135 = sand.u32 %s71, 1
        %s136 = smul.addr %s135, 128
        %s137 = scalar_lea.vmem [#allocation2], %s136
        %s138 = smul.u32 16, %s16
        %p139 = scmp.lt.s32.totalorder %s138, 31
        %s140 = scalar_select %p139, %s138, 31
        %s141 = smul.addr %s140, 8
        %s142 = scalar_lea.vmem %s0, %s141
        %s143 = smul.u32 16, %s16
        %s144 = smul.u32 16, %s16
        %v145 = vld [vmem:[%s142] sm:$0xff]
        %v146 = vld [vmem:[%s142 + $0x8] sm:$0xff]
        %v147 = vld [vmem:[%s142 + $0x10] sm:$0xff]
        %v148 = vld [vmem:[%s142 + $0x18] sm:$0xff]
        %v149 = vld [vmem:[%s142 + $0x20] sm:$0xff]
        %v150 = vld [vmem:[%s142 + $0x28] sm:$0xff]
        %v151 = vld [vmem:[%s142 + $0x30] sm:$0xff]
        %v152 = vld [vmem:[%s142 + $0x38] sm:$0xff]
        %v153 = vld [vmem:[%s142 + $0x40] sm:$0xff]
        %v154 = vld [vmem:[%s142 + $0x48] sm:$0xff]
        %v155 = vld [vmem:[%s142 + $0x50] sm:$0xff]
        %v156 = vld [vmem:[%s142 + $0x58] sm:$0xff]
        %v157 = vld [vmem:[%s142 + $0x60] sm:$0xff]
        %v158 = vld [vmem:[%s142 + $0x68] sm:$0xff]
        %v159 = vld [vmem:[%s142 + $0x70] sm:$0xff]
        %v160 = vld [vmem:[%s142 + $0x78] sm:$0xff]
        %v161 = vld [vmem:[%s1] sm:$0xff]
        %v162 = vld [vmem:[%s1 + $0x8] sm:$0xff]
        %v163 = vld [vmem:[%s1 + $0x10] sm:$0xff]
        %v164 = vld [vmem:[%s1 + $0x18] sm:$0xff]
        %vm165 = vcmask 261120
        %v167 = vsel %vm165, %v145, 0
        %v170 = vsel %vm165, %v146, 0
        %v173 = vsel %vm165, %v147, 0
        %v176 = vsel %vm165, %v148, 0
        %v179 = vsel %vm165, %v149, 0
        %v182 = vsel %vm165, %v150, 0
        %v185 = vsel %vm165, %v151, 0
        %v188 = vsel %vm165, %v152, 0
        %v191 = vsel %vm165, %v153, 0
        %v194 = vsel %vm165, %v154, 0
        %v197 = vsel %vm165, %v155, 0
        %v200 = vsel %vm165, %v156, 0
        %v203 = vsel %vm165, %v157, 0
        %v206 = vsel %vm165, %v158, 0
        %v209 = vsel %vm165, %v159, 0
        %v212 = vsel %vm165, %v160, 0
        %214 = vmatpush.msra.mxu0 0.0
        %215 = vmatpush.msra.mxu0 0.0
        %216 = vmatpush.msra.mxu0 0.0
        %217 = vmatpush.msra.mxu0 0.0
        %218 = vmatpush.msra.mxu0 0.0
        %219 = vmatpush.msra.mxu0 0.0
        %220 = vmatpush.msra.mxu0 0.0
        %221 = vmatpush.msra.mxu0 0.0
        %222 = vmatpush.msra.mxu0 0.0
        %223 = vmatpush.msra.mxu0 0.0
        %224 = vmatpush.msra.mxu0 0.0
        %225 = vmatpush.msra.mxu0 0.0
        %226 = vmatpush.msra.mxu0 %v164
        %227 = vmatpush.msra.mxu0 %v163
        %228 = vmatpush.msra.mxu0 %v162
        %229 = vmatpush.msra.mxu0 %v161
        %230 = vmatmul.f32.gmra.mxu0 %v167
        %v231 = vpop.f32.mrf.mxu0
        %v232 = vadd.f32 0.0, %v231
        %233 = vmatmul.f32.gmra.mxu0 %v170
        %v234 = vpop.f32.mrf.mxu0
        %v235 = vadd.f32 0.0, %v234
        %236 = vmatmul.f32.gmra.mxu0 %v173
        %v237 = vpop.f32.mrf.mxu0
        %v238 = vadd.f32 0.0, %v237
        %239 = vmatmul.f32.gmra.mxu0 %v176
        %v240 = vpop.f32.mrf.mxu0
        %v241 = vadd.f32 0.0, %v240
        %242 = vmatmul.f32.gmra.mxu0 %v179
        %v243 = vpop.f32.mrf.mxu0
        %v244 = vadd.f32 0.0, %v243
        %245 = vmatmul.f32.gmra.mxu0 %v182
        %v246 = vpop.f32.mrf.mxu0
        %v247 = vadd.f32 0.0, %v246
        %248 = vmatmul.f32.gmra.mxu0 %v185
        %v249 = vpop.f32.mrf.mxu0
        %v250 = vadd.f32 0.0, %v249
        %251 = vmatmul.f32.gmra.mxu0 %v188
        %v252 = vpop.f32.mrf.mxu0
        %v253 = vadd.f32 0.0, %v252
        %254 = vmatmul.f32.gmra.mxu0 %v191
        %v255 = vpop.f32.mrf.mxu0
        %v256 = vadd.f32 0.0, %v255
        %257 = vmatmul.f32.gmra.mxu0 %v194
        %v258 = vpop.f32.mrf.mxu0
        %v259 = vadd.f32 0.0, %v258
        %260 = vmatmul.f32.gmra.mxu0 %v197
        %v261 = vpop.f32.mrf.mxu0
        %v262 = vadd.f32 0.0, %v261
        %263 = vmatmul.f32.gmra.mxu0 %v200
        %v264 = vpop.f32.mrf.mxu0
        %v265 = vadd.f32 0.0, %v264
        %266 = vmatmul.f32.gmra.mxu0 %v203
        %v267 = vpop.f32.mrf.mxu0
        %v268 = vadd.f32 0.0, %v267
        %269 = vmatmul.f32.gmra.mxu0 %v206
        %v270 = vpop.f32.mrf.mxu0
        %v271 = vadd.f32 0.0, %v270
        %272 = vmatmul.f32.gmra.mxu0 %v209
        %v273 = vpop.f32.mrf.mxu0
        %v274 = vadd.f32 0.0, %v273
        %275 = vmatmul.f32.gmra.mxu0 %v212
        %v276 = vpop.f32.mrf.mxu0
        %v277 = vadd.f32 0.0, %v276
        %278 = vdwg.mxu0
        %279 = vst [vmem:[%s137] sm:$0xff] %v232
        %280 = vst [vmem:[%s137 + $0x8] sm:$0xff] %v235
        %281 = vst [vmem:[%s137 + $0x10] sm:$0xff] %v238
        %282 = vst [vmem:[%s137 + $0x18] sm:$0xff] %v241
        %283 = vst [vmem:[%s137 + $0x20] sm:$0xff] %v244
        %284 = vst [vmem:[%s137 + $0x28] sm:$0xff] %v247
        %285 = vst [vmem:[%s137 + $0x30] sm:$0xff] %v250
        %286 = vst [vmem:[%s137 + $0x38] sm:$0xff] %v253
        %287 = vst [vmem:[%s137 + $0x40] sm:$0xff] %v256
        %288 = vst [vmem:[%s137 + $0x48] sm:$0xff] %v259
        %289 = vst [vmem:[%s137 + $0x50] sm:$0xff] %v262
        %290 = vst [vmem:[%s137 + $0x58] sm:$0xff] %v265
        %291 = vst [vmem:[%s137 + $0x60] sm:$0xff] %v268
        %292 = vst [vmem:[%s137 + $0x68] sm:$0xff] %v271
        %293 = vst [vmem:[%s137 + $0x70] sm:$0xff] %v274
        %294 = vst [vmem:[%s137 + $0x78] sm:$0xff] %v277
        %s295 = sand.u32 %s71, 1
        %s296 = scalar_lea.sflag [#allocation3], %s295
        %s297 = sand.u32 %s71, 1
        %s298 = smul.addr %s297, 128
        %s299 = scalar_lea.vmem [#allocation2], %s298
        // Predicated region
        $region29: #{tpu_custom_call.1} parent=27 // pred_check
          %p300 = pneg %p81
        $region30: #{tpu_custom_call.1} parent=27 // pred_check_branch
          %302 = sbr.rel (%p300) target = $region32
        $region31: #{tpu_custom_call.1} parent=27 // pred_region
          %s303 = smul.u32 16, %s16
          %305 = vsyncadd %s296, 0
          %s306 = smul.addr %s303, 8
          %s307 = scalar_lea.hbm %s2, %s306
          %s308 = sshll.u32 %s299, 4
          %s309 = int_to_ptr.vmem [resolvable:$true] %s308
          %s310 = sshll.u32 %s307, 4
          %s311 = int_to_ptr.hbm [resolvable:$true] %s310
          %316 = dma.vmem_to_hbm [thread:$0]  %s309, 2048, %s311, %s296, 128, 128, 8
        $region32: #{tpu_custom_call.1} parent=27 // pred_fallthru
          _
      $region28: #{tpu_custom_call.1} parent=5 // pred_fallthru
        _
      %p317 = scmp.le.s32.totalorder 2, %s11
      // Predicated region
      $region33: #{tpu_custom_call.1} parent=5 // pred_check
        %p318 = pneg %p317
      $region34: #{tpu_custom_call.1} parent=5 // pred_check_branch
        %320 = sbr.rel (%p318) target = $region36
      $region35: #{tpu_custom_call.1} parent=5 // pred_region
        %s321 = ssub.s32 %s11, 2
        // Predicated region
        $region37: #{tpu_custom_call.1} parent=35 // pred_check
          %p322 = pneg %p87
        $region38: #{tpu_custom_call.1} parent=35 // pred_check_branch
          %324 = sbr.rel (%p322) target = $region40
        $region39: #{tpu_custom_call.1} parent=35 // pred_region
          %s325 = sand.u32 %s72, 1
          %s326 = scalar_lea.sflag [#allocation3], %s325
          %s327 = sand.u32 %s72, 1
          %s328 = smul.addr %s327, 128
          %s329 = scalar_lea.vmem [#allocation2], %s328
          %331 = dma.done %s326, 2048
        $region40: #{tpu_custom_call.1} parent=35 // pred_fallthru
          _
      $region36: #{tpu_custom_call.1} parent=5 // pred_fallthru
        _
    $region6: #{tpu_custom_call.1} parent=1 // loop_footer
      %s15 = sadd.s32 1, %s11
    $region7: #{tpu_custom_call.1} parent=1 // loop_footer_branch
      %10 = sbr.rel target = $region3
    $region8: #{tpu_custom_call.1} parent=1 // loop_exit
      _
    %332 = vsyncpa [#allocation3], 1
    %s333 = scalar_lea.sflag [#allocation3], 1
    %334 = vsyncpa %s333, 1

</llo_original>
